<compile_context>
chip_gen: v5e
topology: v5e:2x2
jax: 0.10.0
libtpu: 0.0.40
codegen_flags: <defaults>
</compile_context>

<pallas_src>
import functools

import jax
import jax.numpy as jnp
from jax.experimental import pallas as pl
from jax.experimental.pallas import tpu as pltpu

HIDDEN = 100           # real hidden width (PyTorch)
HID_PAD = 128          # lane-padded hidden width
NUM_HIDDEN_LAYERS = 5  # extra Linear(100,100)+ReLU blocks in build_relu
OUT_SUBLANES = 8       # sublane rows of the replicated final weight row


def _mlp_kernel(x_ref, w0t_ref, wstack_ref, w6t_ref, b_ref, o_ref):
    """Fused 7-layer ReLU MLP + abs for one (tb, dim) batch tile.

    Feature-major compute: h is (128, tb) with the batch on the lane axis.
    o_ref is (1, tb): row 0 of the final matmul result.
    """
    bias = b_ref[...]                                   # (128, 8) f32, loaded once

    # Layer 0: h[f, b] = sum_d W0^T[f, d] * x[b, d]  -> (128, tb), f32 acc.
    x_bf = x_ref[...].astype(jnp.bfloat16)
    h = jax.lax.dot_general(
        w0t_ref[...], x_bf,
        dimension_numbers=(((1,), (1,)), ((), ())),
        preferred_element_type=jnp.float32)
    h = jnp.maximum(h + bias[:, 0:1], 0.0)

    # Layers 1..5: W^T(128,128) @ h(128,tb); batch stays on the MXU N axis.
    for l in range(NUM_HIDDEN_LAYERS):
        h = jnp.dot(wstack_ref[l], h.astype(jnp.bfloat16),
                    preferred_element_type=jnp.float32)
        h = jnp.maximum(h + bias[:, l + 1:l + 2], 0.0)

    # Final Linear(100,1): (8,128) @ (128,tb) -> (8,tb); row 0 is the result.
    y = jnp.dot(w6t_ref[...], h.astype(jnp.bfloat16),
                preferred_element_type=jnp.float32)
    o_ref[...] = jnp.abs(y[0:1, :] + bias[0:1, 6:7])


def init_params(key, dim):
    """Deterministic PyTorch-Linear-style init (uniform +/- 1/sqrt(fan_in))."""
    params = []
    sizes = [(dim, HIDDEN)] + [(HIDDEN, HIDDEN)] * NUM_HIDDEN_LAYERS + [(HIDDEN, 1)]
    for fan_in, fan_out in sizes:
        key, kw, kb = jax.random.split(key, 3)
        bound = 1.0 / jnp.sqrt(jnp.float32(fan_in))
        w = jax.random.uniform(kw, (fan_in, fan_out), jnp.float32, -bound, bound)
        b = jax.random.uniform(kb, (fan_out,), jnp.float32, -bound, bound)
        params.append((w, b))
    return params


def prep_params(params, dim):
    """Pad, transpose, stack, and bf16-cast the params ONCE (hoisted from forward).

    Returns (w0t, w_stack_t, w6t, b_mat):
      w0t       (128, dim)    bf16  layer-0 weight, transposed (out-feature major)
      w_stack_t (5, 128, 128) bf16  hidden-layer weights, transposed
      w6t       (8, 128)      bf16  final (100,1) column replicated on 8 sublanes
      b_mat     (128, 8)      f32   biases; column l = layer-l bias; col 6 row 0 = final
    """
    w0, b0 = params[0]
    w0t = jnp.zeros((HID_PAD, dim), jnp.float32).at[:HIDDEN, :].set(w0.T)

    wts = []
    bcols = [jnp.zeros((HID_PAD,), jnp.float32).at[:HIDDEN].set(b0)]
    for (w, b) in params[1:1 + NUM_HIDDEN_LAYERS]:
        wts.append(jnp.zeros((HID_PAD, HID_PAD), jnp.float32)
                   .at[:HIDDEN, :HIDDEN].set(w.T))
        bcols.append(jnp.zeros((HID_PAD,), jnp.float32).at[:HIDDEN].set(b))
    w_stack_t = jnp.stack(wts)                                     # (5, 128, 128)

    w6, b6 = params[-1]                                            # (100, 1), (1,)
    w6_row = jnp.zeros((HID_PAD,), jnp.float32).at[:HIDDEN].set(w6[:, 0])
    w6t = jnp.tile(w6_row[None, :], (OUT_SUBLANES, 1))             # (8, 128)
    bcols.append(jnp.zeros((HID_PAD,), jnp.float32).at[0].set(b6[0]))

    b_mat = jnp.stack(bcols, axis=1)                               # (128, 7)
    b_mat = jnp.pad(b_mat, ((0, 0), (0, 8 - b_mat.shape[1])))      # (128, 8)

    return (w0t.astype(jnp.bfloat16),
            w_stack_t.astype(jnp.bfloat16),
            w6t.astype(jnp.bfloat16),
            b_mat)


def _round_up(n, m):
    return ((n + m - 1) // m) * m


def _pick_tb(B, dim, tb_max):
    """Batch-tile rows per grid step.

    * B <= 128: a single exact tile (block dims == array dims, always legal).
    * Otherwise: lane-dense multiple-of-128 tiles, capped so the grid has
      >= 2 steps (v7x megacore) and the double-buffered f32 x tile stays
      within a few MiB of VMEM even for large dim.
    """
    if B <= 128:
        return B
    rows_cap = max(128, (((1 << 20) // dim) // 128) * 128)   # ~4 MiB/buffer x tile
    tb = min(tb_max, rows_cap, _round_up((B + 1) // 2, 128))
    return max(128, (tb // 128) * 128)


@functools.partial(jax.jit, static_argnames=("tb",))
def localizer_forward(x, packed, tb=1024):
    """x: (B, dim) f32, packed = prep_params(...) -> (B,) f32 = abs(reluNet(x))."""
    w0t, w_stack_t, w6t, b_mat = packed
    B, dim = x.shape

    tb_eff = _pick_tb(B, dim, tb)
    grid = (pl.cdiv(B, tb_eff),)           # ragged last tile handled by masking

    weight_bytes = (w0t.size + w_stack_t.size + w6t.size) * 2 + b_mat.size * 4
    cost = pl.CostEstimate(
        flops=2 * B * (dim * HID_PAD
                       + NUM_HIDDEN_LAYERS * HID_PAD * HID_PAD
                       + HID_PAD),
        transcendentals=0,
        bytes_accessed=4 * B * dim + 4 * B + weight_bytes,
    )

    out = pl.pallas_call(
        _mlp_kernel,
        out_shape=jax.ShapeDtypeStruct((1, B), jnp.float32),
        grid=grid,
        in_specs=[
            pl.BlockSpec((tb_eff, dim), lambda i: (i, 0)),       # x: batch-tiled
            pl.BlockSpec(w0t.shape, lambda i: (0, 0)),           # weights: constant blocks
            pl.BlockSpec(w_stack_t.shape, lambda i: (0, 0, 0)),
            pl.BlockSpec(w6t.shape, lambda i: (0, 0)),
            pl.BlockSpec(b_mat.shape, lambda i: (0, 0)),
        ],
        out_specs=pl.BlockSpec((1, tb_eff), lambda i: (0, i)),
        compiler_params=pltpu.CompilerParams(
            dimension_semantics=("parallel",),       # megacore batch sharding on v7x
            vmem_limit_bytes=32 * 1024 * 1024),      # explicit scoped-VMEM budget (v5e)
        cost_estimate=cost,
    )(x, w0t, w_stack_t, w6t, b_mat)

    # TODO(synk): PyTorch .squeeze() returns a 0-d scalar when B == 1; we return (1,).
    return out[0]


def _reference(x, params):
    h = x
    for li, (w, b) in enumerate(params):
        h = h @ w + b
        if li < len(params) - 1:
            h = jnp.maximum(h, 0.0)
    return jnp.abs(jnp.squeeze(h))


if __name__ == "__main__":
    key = jax.random.PRNGKey(0)
    k_p, k_x1, k_x2 = jax.random.split(key, 3)

    dim = 32
    params = init_params(k_p, dim)
    packed = prep_params(params, dim)    # packed once, reused across calls

    # Small single-tile case (grid = 1, exact batch tile).
    x1 = jax.random.normal(k_x1, (16, dim), jnp.float32)
    y1 = jax.block_until_ready(localizer_forward(x1, packed))
    y1_ref = _reference(x1, params)
    assert y1.shape == (16,), y1.shape
    assert jnp.allclose(y1, y1_ref, atol=3e-2, rtol=3e-2), (
        float(jnp.max(jnp.abs(y1 - y1_ref))))

    # Multi-tile case with a ragged last tile (grid = 2, masked edge, no pad copy).
    x2 = jax.random.normal(k_x2, (1000, dim), jnp.float32)
    y2 = jax.block_until_ready(localizer_forward(x2, packed))
    y2_ref = _reference(x2, params)
    assert y2.shape == (1000,), y2.shape
    assert jnp.allclose(y2, y2_ref, atol=3e-2, rtol=3e-2), (
        float(jnp.max(jnp.abs(y2 - y2_ref))))

    print("KERNEL_OK")
</pallas_src>

<mosaic_0001>
module attributes {stable_mosaic.version = 11 : i64} {
  func.func @_mlp_kernel(%arg0: i32, %arg1: memref<16x32xf32, #tpu.memory_space<vmem>>, %arg2: memref<128x32xbf16, #tpu.memory_space<vmem>>, %arg3: memref<5x128x128xbf16, #tpu.memory_space<vmem>>, %arg4: memref<8x128xbf16, #tpu.memory_space<vmem>>, %arg5: memref<128x8xf32, #tpu.memory_space<vmem>>, %arg6: memref<1x16xf32, #tpu.memory_space<vmem>>) attributes {dimension_semantics = [#tpu.dimension_semantics<parallel>], iteration_bounds = array<i64: 1>, scalar_prefetch = 0 : i64, scratch_operands = 0 : i64, tpu.core_type = #tpu.core_type<tc>, window_params = [{transform_indices = @transform_0, window_bounds = array<i64: 16, 32>}, {pipeline_mode = #tpu.pipeline_mode<synchronous>, transform_indices = @transform_1, window_bounds = array<i64: 128, 32>}, {pipeline_mode = #tpu.pipeline_mode<synchronous>, transform_indices = @transform_2, window_bounds = array<i64: 5, 128, 128>}, {pipeline_mode = #tpu.pipeline_mode<synchronous>, transform_indices = @transform_3, window_bounds = array<i64: 8, 128>}, {pipeline_mode = #tpu.pipeline_mode<synchronous>, transform_indices = @transform_4, window_bounds = array<i64: 128, 8>}, {transform_indices = @transform_5, window_bounds = array<i64: 1, 16>}]} {
    %c0 = arith.constant 0 : index
    %c0_0 = arith.constant 0 : index
    %0 = vector.load %arg5[%c0, %c0_0] : memref<128x8xf32, #tpu.memory_space<vmem>>, vector<128x8xf32>
    %c0_1 = arith.constant 0 : index
    %c0_2 = arith.constant 0 : index
    %1 = vector.load %arg1[%c0_1, %c0_2] : memref<16x32xf32, #tpu.memory_space<vmem>>, vector<16x32xf32>
    %2 = arith.truncf %1 : vector<16x32xf32> to vector<16x32xbf16>
    %c0_3 = arith.constant 0 : index
    %c0_4 = arith.constant 0 : index
    %3 = vector.load %arg2[%c0_3, %c0_4] : memref<128x32xbf16, #tpu.memory_space<vmem>>, vector<128x32xbf16>
    %cst = arith.constant dense<0.000000e+00> : vector<128x16xf32>
    %4 = tpu.matmul %3, %2, %cst {dimension_numbers = #tpu.dot_dimension_numbers<[1], [1], [0], [0], [0, 0, 1, 0], [], []>} : vector<128x32xbf16>, vector<16x32xbf16>, vector<128x16xf32> -> vector<128x16xf32>
    %5 = vector.extract_strided_slice %0 {offsets = [0, 0], sizes = [128, 1], strides = [1, 1]} : vector<128x8xf32> to vector<128x1xf32>
    %6 = vector.broadcast %5 : vector<128x1xf32> to vector<128x16xf32>
    %7 = arith.addf %4, %6 : vector<128x16xf32>
    %cst_5 = arith.constant 0.000000e+00 : f32
    %8 = vector.broadcast %cst_5 : f32 to vector<128x16xf32>
    %9 = arith.maximumf %7, %8 : vector<128x16xf32>
    %c0_6 = arith.constant 0 : index
    %c0_7 = arith.constant 0 : index
    %c0_8 = arith.constant 0 : index
    %10 = vector.load %arg3[%c0_6, %c0_7, %c0_8] : memref<5x128x128xbf16, #tpu.memory_space<vmem>>, vector<1x128x128xbf16>
    %11 = vector.shape_cast %10 : vector<1x128x128xbf16> to vector<128x128xbf16>
    %12 = arith.truncf %9 : vector<128x16xf32> to vector<128x16xbf16>
    %cst_9 = arith.constant dense<0.000000e+00> : vector<128x16xf32>
    %13 = tpu.matmul %11, %12, %cst_9 {dimension_numbers = #tpu.dot_dimension_numbers<[1], [0], [0], [1], [0, 0, 1, 1], [], []>} : vector<128x128xbf16>, vector<128x16xbf16>, vector<128x16xf32> -> vector<128x16xf32>
    %14 = vector.extract_strided_slice %0 {offsets = [0, 1], sizes = [128, 1], strides = [1, 1]} : vector<128x8xf32> to vector<128x1xf32>
    %15 = vector.broadcast %14 : vector<128x1xf32> to vector<128x16xf32>
    %16 = arith.addf %13, %15 : vector<128x16xf32>
    %cst_10 = arith.constant 0.000000e+00 : f32
    %17 = vector.broadcast %cst_10 : f32 to vector<128x16xf32>
    %18 = arith.maximumf %16, %17 : vector<128x16xf32>
    %c1 = arith.constant 1 : index
    %c0_11 = arith.constant 0 : index
    %c0_12 = arith.constant 0 : index
    %19 = vector.load %arg3[%c1, %c0_11, %c0_12] : memref<5x128x128xbf16, #tpu.memory_space<vmem>>, vector<1x128x128xbf16>
    %20 = vector.shape_cast %19 : vector<1x128x128xbf16> to vector<128x128xbf16>
    %21 = arith.truncf %18 : vector<128x16xf32> to vector<128x16xbf16>
    %cst_13 = arith.constant dense<0.000000e+00> : vector<128x16xf32>
    %22 = tpu.matmul %20, %21, %cst_13 {dimension_numbers = #tpu.dot_dimension_numbers<[1], [0], [0], [1], [0, 0, 1, 1], [], []>} : vector<128x128xbf16>, vector<128x16xbf16>, vector<128x16xf32> -> vector<128x16xf32>
    %23 = vector.extract_strided_slice %0 {offsets = [0, 2], sizes = [128, 1], strides = [1, 1]} : vector<128x8xf32> to vector<128x1xf32>
    %24 = vector.broadcast %23 : vector<128x1xf32> to vector<128x16xf32>
    %25 = arith.addf %22, %24 : vector<128x16xf32>
    %cst_14 = arith.constant 0.000000e+00 : f32
    %26 = vector.broadcast %cst_14 : f32 to vector<128x16xf32>
    %27 = arith.maximumf %25, %26 : vector<128x16xf32>
    %c2 = arith.constant 2 : index
    %c0_15 = arith.constant 0 : index
    %c0_16 = arith.constant 0 : index
    %28 = vector.load %arg3[%c2, %c0_15, %c0_16] : memref<5x128x128xbf16, #tpu.memory_space<vmem>>, vector<1x128x128xbf16>
    %29 = vector.shape_cast %28 : vector<1x128x128xbf16> to vector<128x128xbf16>
    %30 = arith.truncf %27 : vector<128x16xf32> to vector<128x16xbf16>
    %cst_17 = arith.constant dense<0.000000e+00> : vector<128x16xf32>
    %31 = tpu.matmul %29, %30, %cst_17 {dimension_numbers = #tpu.dot_dimension_numbers<[1], [0], [0], [1], [0, 0, 1, 1], [], []>} : vector<128x128xbf16>, vector<128x16xbf16>, vector<128x16xf32> -> vector<128x16xf32>
    %32 = vector.extract_strided_slice %0 {offsets = [0, 3], sizes = [128, 1], strides = [1, 1]} : vector<128x8xf32> to vector<128x1xf32>
    %33 = vector.broadcast %32 : vector<128x1xf32> to vector<128x16xf32>
    %34 = arith.addf %31, %33 : vector<128x16xf32>
    %cst_18 = arith.constant 0.000000e+00 : f32
    %35 = vector.broadcast %cst_18 : f32 to vector<128x16xf32>
    %36 = arith.maximumf %34, %35 : vector<128x16xf32>
    %c3 = arith.constant 3 : index
    %c0_19 = arith.constant 0 : index
    %c0_20 = arith.constant 0 : index
    %37 = vector.load %arg3[%c3, %c0_19, %c0_20] : memref<5x128x128xbf16, #tpu.memory_space<vmem>>, vector<1x128x128xbf16>
    %38 = vector.shape_cast %37 : vector<1x128x128xbf16> to vector<128x128xbf16>
    %39 = arith.truncf %36 : vector<128x16xf32> to vector<128x16xbf16>
    %cst_21 = arith.constant dense<0.000000e+00> : vector<128x16xf32>
    %40 = tpu.matmul %38, %39, %cst_21 {dimension_numbers = #tpu.dot_dimension_numbers<[1], [0], [0], [1], [0, 0, 1, 1], [], []>} : vector<128x128xbf16>, vector<128x16xbf16>, vector<128x16xf32> -> vector<128x16xf32>
    %41 = vector.extract_strided_slice %0 {offsets = [0, 4], sizes = [128, 1], strides = [1, 1]} : vector<128x8xf32> to vector<128x1xf32>
    %42 = vector.broadcast %41 : vector<128x1xf32> to vector<128x16xf32>
    %43 = arith.addf %40, %42 : vector<128x16xf32>
    %cst_22 = arith.constant 0.000000e+00 : f32
    %44 = vector.broadcast %cst_22 : f32 to vector<128x16xf32>
    %45 = arith.maximumf %43, %44 : vector<128x16xf32>
    %c4 = arith.constant 4 : index
    %c0_23 = arith.constant 0 : index
    %c0_24 = arith.constant 0 : index
    %46 = vector.load %arg3[%c4, %c0_23, %c0_24] : memref<5x128x128xbf16, #tpu.memory_space<vmem>>, vector<1x128x128xbf16>
    %47 = vector.shape_cast %46 : vector<1x128x128xbf16> to vector<128x128xbf16>
    %48 = arith.truncf %45 : vector<128x16xf32> to vector<128x16xbf16>
    %cst_25 = arith.constant dense<0.000000e+00> : vector<128x16xf32>
    %49 = tpu.matmul %47, %48, %cst_25 {dimension_numbers = #tpu.dot_dimension_numbers<[1], [0], [0], [1], [0, 0, 1, 1], [], []>} : vector<128x128xbf16>, vector<128x16xbf16>, vector<128x16xf32> -> vector<128x16xf32>
    %50 = vector.extract_strided_slice %0 {offsets = [0, 5], sizes = [128, 1], strides = [1, 1]} : vector<128x8xf32> to vector<128x1xf32>
    %51 = vector.broadcast %50 : vector<128x1xf32> to vector<128x16xf32>
    %52 = arith.addf %49, %51 : vector<128x16xf32>
    %cst_26 = arith.constant 0.000000e+00 : f32
    %53 = vector.broadcast %cst_26 : f32 to vector<128x16xf32>
    %54 = arith.maximumf %52, %53 : vector<128x16xf32>
    %c0_27 = arith.constant 0 : index
    %c0_28 = arith.constant 0 : index
    %55 = vector.load %arg4[%c0_27, %c0_28] : memref<8x128xbf16, #tpu.memory_space<vmem>>, vector<8x128xbf16>
    %56 = arith.truncf %54 : vector<128x16xf32> to vector<128x16xbf16>
    %cst_29 = arith.constant dense<0.000000e+00> : vector<8x16xf32>
    %57 = tpu.matmul %55, %56, %cst_29 {dimension_numbers = #tpu.dot_dimension_numbers<[1], [0], [0], [1], [0, 0, 1, 1], [], []>} : vector<8x128xbf16>, vector<128x16xbf16>, vector<8x16xf32> -> vector<8x16xf32>
    %58 = vector.extract_strided_slice %57 {offsets = [0, 0], sizes = [1, 16], strides = [1, 1]} : vector<8x16xf32> to vector<1x16xf32>
    %59 = vector.extract_strided_slice %0 {offsets = [0, 6], sizes = [1, 1], strides = [1, 1]} : vector<128x8xf32> to vector<1x1xf32>
    %60 = vector.broadcast %59 : vector<1x1xf32> to vector<1x16xf32>
    %61 = arith.addf %58, %60 : vector<1x16xf32>
    %62 = math.absf %61 : vector<1x16xf32>
    %c0_30 = arith.constant 0 : index
    %c0_31 = arith.constant 0 : index
    %63 = vector.load %arg6[%c0_30, %c0_31] : memref<1x16xf32, #tpu.memory_space<vmem>>, vector<1x16xf32>
    tpu.vector_store %arg6[%c0_30, %c0_31], %62 {strides = array<i32>} : memref<1x16xf32, #tpu.memory_space<vmem>>, vector<1x16xf32>,
    return
  }
  func.func @transform_0(%arg0: i32) -> (i32, i32) {
    %c0_i32 = arith.constant 0 : i32
    %c0_i32_0 = arith.constant 0 : i32
    return %arg0, %c0_i32 : i32, i32
  }
  func.func @transform_1(%arg0: i32) -> (i32, i32) {
    %c0_i32 = arith.constant 0 : i32
    %c0_i32_0 = arith.constant 0 : i32
    %c0_i32_1 = arith.constant 0 : i32
    return %c0_i32, %c0_i32_0 : i32, i32
  }
  func.func @transform_2(%arg0: i32) -> (i32, i32, i32) {
    %c0_i32 = arith.constant 0 : i32
    %c0_i32_0 = arith.constant 0 : i32
    %c0_i32_1 = arith.constant 0 : i32
    %c0_i32_2 = arith.constant 0 : i32
    return %c0_i32, %c0_i32_0, %c0_i32_1 : i32, i32, i32
  }
  func.func @transform_3(%arg0: i32) -> (i32, i32) {
    %c0_i32 = arith.constant 0 : i32
    %c0_i32_0 = arith.constant 0 : i32
    %c0_i32_1 = arith.constant 0 : i32
    return %c0_i32, %c0_i32_0 : i32, i32
  }
  func.func @transform_4(%arg0: i32) -> (i32, i32) {
    %c0_i32 = arith.constant 0 : i32
    %c0_i32_0 = arith.constant 0 : i32
    %c0_i32_1 = arith.constant 0 : i32
    return %c0_i32, %c0_i32_0 : i32, i32
  }
  func.func @transform_5(%arg0: i32) -> (i32, i32) {
    %c0_i32 = arith.constant 0 : i32
    %c0_i32_0 = arith.constant 0 : i32
    return %c0_i32, %arg0 : i32, i32
  }
}

</mosaic_0001>

<llo_original>
// kernel: localizer_forward.1
$region0: #{localizer_forward.1}
  #allocation0 [shape = 'u32[]', space=smem, size = 0x4, offset = 0x4, fixed_abs, tag = 'smem constant byte address 0x4 - core index']
  #allocation1 [shape = 'u32[72,128]{1,0:T(1,128)}', space=vmem, size = 0x9000, scoped, tag = 'internal scratch']
  %s0 = inlined_call_operand.vmem [shape: f32[16,32], index: 0, kind: input, shape index: {}]
  %s1 = inlined_call_operand.vmem [shape: bf16[128,32], index: 1, kind: input, shape index: {}]
  %s2 = inlined_call_operand.hbm [shape: bf16[5,128,128], index: 2, kind: input, shape index: {}]
  %s3 = inlined_call_operand.vmem [shape: bf16[8,128], index: 3, kind: input, shape index: {}]
  %s4 = inlined_call_operand.vmem [shape: f32[128,8], index: 4, kind: input, shape index: {}]
  %s5 = inlined_call_operand.hbm [shape: f32[1,16], index: 5, kind: output, shape index: {}]
  %s6 = sld [smem:[#allocation0]]
  $region34: #{localizer_forward.1} parent=0
    _
  %s8 = ssub.s32 1, %s6
  %s9 = scalar_select 0, %s8, %s6
  $region1: #{localizer_forward.1} parent=0
    #allocation2 [shape = 'u8[163840]{0}', space=vmem, size = 0x28000, scoped, tag = 'input window, operand 2, single buffered']
    #allocation3 [shape = 's32[1]{0}', space=sflag, size = 0x4, scoped, tag = 'scoped memory for localizer_forward.1']
    #allocation4 [shape = 's32[1]{0}', space=sflag, size = 0x4, scoped, tag = 'scoped memory for localizer_forward.1']
    #allocation5 [shape = 'u8[512]{0}', space=vmem, size = 0x400, scoped, tag = 'output window, operand 0, single buffered']
    %10 = vsyncpa [#allocation3], 0
    %11 = vsyncpa [#allocation4], 0
    // Predicated region
    $region2: #{localizer_forward.1} parent=1 // pred_check
      _
    $region3: #{localizer_forward.1} parent=1 // pred_check_branch
      %13 = sbr.rel (0) target = $region5
    $region4: #{localizer_forward.1} parent=1 // pred_region
      _
    $region5: #{localizer_forward.1} parent=1 // pred_fallthru
      _
    // Predicated region
    $region6: #{localizer_forward.1} parent=1 // pred_check
      _
    $region7: #{localizer_forward.1} parent=1 // pred_check_branch
      %15 = sbr.rel (0) target = $region9
    $region8: #{localizer_forward.1} parent=1 // pred_region
      _
    $region9: #{localizer_forward.1} parent=1 // pred_fallthru
      _
    // Predicated region
    $region10: #{localizer_forward.1} parent=1 // pred_check
      _
    $region11: #{localizer_forward.1} parent=1 // pred_check_branch
      %17 = sbr.rel (0) target = $region13
    $region12: #{localizer_forward.1} parent=1 // pred_region
      %19 = vsyncadd [#allocation3], 0
      %s20 = sshll.u32 %s2, 4
      %s21 = int_to_ptr.hbm [resolvable:$true] %s20
      %s22 = sshll.u32 [#allocation2], 4
      %s23 = int_to_ptr.vmem [resolvable:$true] %s22
      %28 = dma.hbm_to_vmem [thread:$0]  %s21, 5120, %s23, [#allocation3], 64, 64, 4
    $region13: #{localizer_forward.1} parent=1 // pred_fallthru
      _
    // Predicated region
    $region14: #{localizer_forward.1} parent=1 // pred_check
      _
    $region15: #{localizer_forward.1} parent=1 // pred_check_branch
      %30 = sbr.rel (0) target = $region17
    $region16: #{localizer_forward.1} parent=1 // pred_region
      _
    $region17: #{localizer_forward.1} parent=1 // pred_fallthru
      _
    // Predicated region
    $region18: #{localizer_forward.1} parent=1 // pred_check
      _
    $region19: #{localizer_forward.1} parent=1 // pred_check_branch
      %32 = sbr.rel (0) target = $region21
    $region20: #{localizer_forward.1} parent=1 // pred_region
      _
    $region21: #{localizer_forward.1} parent=1 // pred_fallthru
      _
    // Predicated region
    $region22: #{localizer_forward.1} parent=1 // pred_check
      _
    $region23: #{localizer_forward.1} parent=1 // pred_check_branch
      %34 = sbr.rel (0) target = $region25
    $region24: #{localizer_forward.1} parent=1 // pred_region
      %36 = dma.done [#allocation3], 5120
    $region25: #{localizer_forward.1} parent=1 // pred_fallthru
      _
    %v38 = vld [vmem:[%s4] sm:$0xff]
    %v39 = vld [vmem:[%s4 + $0x8] sm:$0xff]
    %v40 = vld [vmem:[%s4 + $0x10] sm:$0xff]
    %v41 = vld [vmem:[%s4 + $0x18] sm:$0xff]
    %v42 = vld [vmem:[%s4 + $0x20] sm:$0xff]
    %v43 = vld [vmem:[%s4 + $0x28] sm:$0xff]
    %v44 = vld [vmem:[%s4 + $0x30] sm:$0xff]
    %v45 = vld [vmem:[%s4 + $0x38] sm:$0xff]
    %v46 = vld [vmem:[%s4 + $0x40] sm:$0xff]
    %v47 = vld [vmem:[%s4 + $0x48] sm:$0xff]
    %v48 = vld [vmem:[%s4 + $0x50] sm:$0xff]
    %v49 = vld [vmem:[%s4 + $0x58] sm:$0xff]
    %v50 = vld [vmem:[%s4 + $0x60] sm:$0xff]
    %v51 = vld [vmem:[%s4 + $0x68] sm:$0xff]
    %v52 = vld [vmem:[%s4 + $0x70] sm:$0xff]
    %v53 = vld [vmem:[%s4 + $0x78] sm:$0xff]
    %v54 = vld [vmem:[%s0] sm:$0xff]
    %v55 = vld [vmem:[%s0 + $0x8] sm:$0xff]
    %v56 = vpack.c.bf16 %v55, %v54
    %v57 = vld [vmem:[%s1] sm:$0xf]
    %v58 = vld [vmem:[%s1 + $0x4] sm:$0xf]
    %v59 = vld [vmem:[%s1 + $0x8] sm:$0xf]
    %v60 = vld [vmem:[%s1 + $0xc] sm:$0xf]
    %v61 = vld [vmem:[%s1 + $0x10] sm:$0xf]
    %v62 = vld [vmem:[%s1 + $0x14] sm:$0xf]
    %v63 = vld [vmem:[%s1 + $0x18] sm:$0xf]
    %v64 = vld [vmem:[%s1 + $0x1c] sm:$0xf]
    %v65 = vld [vmem:[%s1 + $0x20] sm:$0xf]
    %v66 = vld [vmem:[%s1 + $0x24] sm:$0xf]
    %v67 = vld [vmem:[%s1 + $0x28] sm:$0xf]
    %v68 = vld [vmem:[%s1 + $0x2c] sm:$0xf]
    %v69 = vld [vmem:[%s1 + $0x30] sm:$0xf]
    %v70 = vld [vmem:[%s1 + $0x34] sm:$0xf]
    %v71 = vld [vmem:[%s1 + $0x38] sm:$0xf]
    %v72 = vld [vmem:[%s1 + $0x3c] sm:$0xf]
    %74 = vset.pattern.permute.xlu0 0
    %75 = vperm.xlu0 %74, %v38
    %v76 = vpop.permute.xlu0 %75
    %79 = vset.pattern.permute.xlu0 0
    %80 = vperm.xlu0 %79, %v39
    %v81 = vpop.permute.xlu0 %80
    %84 = vset.pattern.permute.xlu0 0
    %85 = vperm.xlu0 %84, %v40
    %v86 = vpop.permute.xlu0 %85
    %89 = vset.pattern.permute.xlu0 0
    %90 = vperm.xlu0 %89, %v41
    %v91 = vpop.permute.xlu0 %90
    %94 = vset.pattern.permute.xlu0 0
    %95 = vperm.xlu0 %94, %v42
    %v96 = vpop.permute.xlu0 %95
    %99 = vset.pattern.permute.xlu0 0
    %100 = vperm.xlu0 %99, %v43
    %v101 = vpop.permute.xlu0 %100
    %104 = vset.pattern.permute.xlu0 0
    %105 = vperm.xlu0 %104, %v44
    %v106 = vpop.permute.xlu0 %105
    %109 = vset.pattern.permute.xlu0 0
    %110 = vperm.xlu0 %109, %v45
    %v111 = vpop.permute.xlu0 %110
    %114 = vset.pattern.permute.xlu0 0
    %115 = vperm.xlu0 %114, %v46
    %v116 = vpop.permute.xlu0 %115
    %119 = vset.pattern.permute.xlu0 0
    %120 = vperm.xlu0 %119, %v47
    %v121 = vpop.permute.xlu0 %120
    %124 = vset.pattern.permute.xlu0 0
    %125 = vperm.xlu0 %124, %v48
    %v126 = vpop.permute.xlu0 %125
    %129 = vset.pattern.permute.xlu0 0
    %130 = vperm.xlu0 %129, %v49
    %v131 = vpop.permute.xlu0 %130
    %134 = vset.pattern.permute.xlu0 0
    %135 = vperm.xlu0 %134, %v50
    %v136 = vpop.permute.xlu0 %135
    %139 = vset.pattern.permute.xlu0 0
    %140 = vperm.xlu0 %139, %v51
    %v141 = vpop.permute.xlu0 %140
    %144 = vset.pattern.permute.xlu0 0
    %145 = vperm.xlu0 %144, %v52
    %v146 = vpop.permute.xlu0 %145
    %149 = vset.pattern.permute.xlu0 0
    %150 = vperm.xlu0 %149, %v53
    %v151 = vpop.permute.xlu0 %150
    %v169 = vunpack.c.l.b16 %v57
    %v170 = vunpack.c.l.b16 %v58
    %v171 = vunpack.c.l.b16 %v59
    %v172 = vunpack.c.l.b16 %v60
    %v173 = vunpack.c.l.b16 %v61
    %v174 = vunpack.c.l.b16 %v62
    %v175 = vunpack.c.l.b16 %v63
    %v176 = vunpack.c.l.b16 %v64
    %v177 = vunpack.c.l.b16 %v65
    %v178 = vunpack.c.l.b16 %v66
    %v179 = vunpack.c.l.b16 %v67
    %v180 = vunpack.c.l.b16 %v68
    %v181 = vunpack.c.l.b16 %v69
    %v182 = vunpack.c.l.b16 %v70
    %v183 = vunpack.c.l.b16 %v71
    %v184 = vunpack.c.l.b16 %v72
    %v185 = vpack.c.b16 %v170, %v169
    %v186 = vpack.c.b16 %v172, %v171
    %v187 = vpack.c.b16 %v174, %v173
    %v188 = vpack.c.b16 %v176, %v175
    %v189 = vpack.c.b16 %v178, %v177
    %v190 = vpack.c.b16 %v180, %v179
    %v191 = vpack.c.b16 %v182, %v181
    %v192 = vpack.c.b16 %v184, %v183
    %vm193 = vcmask 261120
    %v195 = vsel %vm193, %v185, 0
    %v198 = vsel %vm193, %v186, 0
    %v201 = vsel %vm193, %v187, 0
    %v204 = vsel %vm193, %v188, 0
    %v207 = vsel %vm193, %v189, 0
    %v210 = vsel %vm193, %v190, 0
    %v213 = vsel %vm193, %v191, 0
    %v216 = vsel %vm193, %v192, 0
    %v219 = vsel %vm193, %v56, 0
    %221 = vmatpush.bf16.xpose.msra.mxu0 0
    %222 = vmatpush.bf16.xpose.msra.mxu0 0
    %223 = vmatpush.bf16.xpose.msra.mxu0 0
    %224 = vmatpush.bf16.xpose.msra.mxu0 0
    %225 = vmatpush.bf16.xpose.msra.mxu0 0
    %226 = vmatpush.bf16.xpose.msra.mxu0 0
    %227 = vmatpush.bf16.xpose.msra.mxu0 0
    %228 = vmatpush.bf16.xpose.msra.mxu0 %v219
    %229 = vmatmul.bf16.gmra.mxu0 %v195
    %v230 = vpop.f32.mrf.mxu0
    %v231 = vadd.f32 %v76, %v230
    %v232 = vpop.f32.mrf.mxu0
    %v233 = vadd.f32 %v81, %v232
    %234 = vmatmul.bf16.gmra.mxu0 %v198
    %v235 = vpop.f32.mrf.mxu0
    %v236 = vadd.f32 %v86, %v235
    %v237 = vpop.f32.mrf.mxu0
    %v238 = vadd.f32 %v91, %v237
    %239 = vmatmul.bf16.gmra.mxu0 %v201
    %v240 = vpop.f32.mrf.mxu0
    %v241 = vadd.f32 %v96, %v240
    %v242 = vpop.f32.mrf.mxu0
    %v243 = vadd.f32 %v101, %v242
    %244 = vmatmul.bf16.gmra.mxu0 %v204
    %v245 = vpop.f32.mrf.mxu0
    %v246 = vadd.f32 %v106, %v245
    %v247 = vpop.f32.mrf.mxu0
    %v248 = vadd.f32 %v111, %v247
    %249 = vmatmul.bf16.gmra.mxu0 %v207
    %v250 = vpop.f32.mrf.mxu0
    %v251 = vadd.f32 %v116, %v250
    %v252 = vpop.f32.mrf.mxu0
    %v253 = vadd.f32 %v121, %v252
    %254 = vmatmul.bf16.gmra.mxu0 %v210
    %v255 = vpop.f32.mrf.mxu0
    %v256 = vadd.f32 %v126, %v255
    %v257 = vpop.f32.mrf.mxu0
    %v258 = vadd.f32 %v131, %v257
    %259 = vmatmul.bf16.gmra.mxu0 %v213
    %v260 = vpop.f32.mrf.mxu0
    %v261 = vadd.f32 %v136, %v260
    %v262 = vpop.f32.mrf.mxu0
    %v263 = vadd.f32 %v141, %v262
    %264 = vmatmul.bf16.gmra.mxu0 %v216
    %v265 = vpop.f32.mrf.mxu0
    %v266 = vadd.f32 %v146, %v265
    %v267 = vpop.f32.mrf.mxu0
    %v268 = vadd.f32 %v151, %v267
    %269 = vdwg.mxu0
    %v270 = vmax.f32 %v231, 0.0
    %v271 = vmax.f32 %v233, 0.0
    %v272 = vmax.f32 %v236, 0.0
    %v273 = vmax.f32 %v238, 0.0
    %v274 = vmax.f32 %v241, 0.0
    %v275 = vmax.f32 %v243, 0.0
    %v276 = vmax.f32 %v246, 0.0
    %v277 = vmax.f32 %v248, 0.0
    %v278 = vmax.f32 %v251, 0.0
    %v279 = vmax.f32 %v253, 0.0
    %v280 = vmax.f32 %v256, 0.0
    %v281 = vmax.f32 %v258, 0.0
    %v282 = vmax.f32 %v261, 0.0
    %v283 = vmax.f32 %v263, 0.0
    %v284 = vmax.f32 %v266, 0.0
    %v285 = vmax.f32 %v268, 0.0
    %v286 = vld [vmem:[#allocation2] sm:$0xf]
    %v287 = vld [vmem:[#allocation2 + $0x4] sm:$0xf]
    %v288 = vld [vmem:[#allocation2 + $0x8] sm:$0xf]
    %v289 = vld [vmem:[#allocation2 + $0xc] sm:$0xf]
    %v290 = vld [vmem:[#allocation2 + $0x10] sm:$0xf]
    %v291 = vld [vmem:[#allocation2 + $0x14] sm:$0xf]
    %v292 = vld [vmem:[#allocation2 + $0x18] sm:$0xf]
    %v293 = vld [vmem:[#allocation2 + $0x1c] sm:$0xf]
    %v294 = vld [vmem:[#allocation2 + $0x20] sm:$0xf]
    %v295 = vld [vmem:[#allocation2 + $0x24] sm:$0xf]
    %v296 = vld [vmem:[#allocation2 + $0x28] sm:$0xf]
    %v297 = vld [vmem:[#allocation2 + $0x2c] sm:$0xf]
    %v298 = vld [vmem:[#allocation2 + $0x30] sm:$0xf]
    %v299 = vld [vmem:[#allocation2 + $0x34] sm:$0xf]
    %v300 = vld [vmem:[#allocation2 + $0x38] sm:$0xf]
    %v301 = vld [vmem:[#allocation2 + $0x3c] sm:$0xf]
    %v302 = vpack.c.bf16 %v271, %v270
    %v303 = vpack.c.bf16 %v273, %v272
    %v304 = vpack.c.bf16 %v275, %v274
    %v305 = vpack.c.bf16 %v277, %v276
    %v306 = vpack.c.bf16 %v279, %v278
    %v307 = vpack.c.bf16 %v281, %v280
    %v308 = vpack.c.bf16 %v283, %v282
    %v309 = vpack.c.bf16 %v285, %v284
    %310 = vset.pattern.permute.xlu0 1
    %311 = vperm.xlu0 %310, %v38
    %v312 = vpop.permute.xlu0 %311
    %314 = vset.pattern.permute.xlu0 1
    %315 = vperm.xlu0 %314, %v39
    %v316 = vpop.permute.xlu0 %315
    %318 = vset.pattern.permute.xlu0 1
    %319 = vperm.xlu0 %318, %v40
    %v320 = vpop.permute.xlu0 %319
    %322 = vset.pattern.permute.xlu0 1
    %323 = vperm.xlu0 %322, %v41
    %v324 = vpop.permute.xlu0 %323
    %326 = vset.pattern.permute.xlu0 1
    %327 = vperm.xlu0 %326, %v42
    %v328 = vpop.permute.xlu0 %327
    %330 = vset.pattern.permute.xlu0 1
    %331 = vperm.xlu0 %330, %v43
    %v332 = vpop.permute.xlu0 %331
    %334 = vset.pattern.permute.xlu0 1
    %335 = vperm.xlu0 %334, %v44
    %v336 = vpop.permute.xlu0 %335
    %338 = vset.pattern.permute.xlu0 1
    %339 = vperm.xlu0 %338, %v45
    %v340 = vpop.permute.xlu0 %339
    %342 = vset.pattern.permute.xlu0 1
    %343 = vperm.xlu0 %342, %v46
    %v344 = vpop.permute.xlu0 %343
    %346 = vset.pattern.permute.xlu0 1
    %347 = vperm.xlu0 %346, %v47
    %v348 = vpop.permute.xlu0 %347
    %350 = vset.pattern.permute.xlu0 1
    %351 = vperm.xlu0 %350, %v48
    %v352 = vpop.permute.xlu0 %351
    %354 = vset.pattern.permute.xlu0 1
    %355 = vperm.xlu0 %354, %v49
    %v356 = vpop.permute.xlu0 %355
    %358 = vset.pattern.permute.xlu0 1
    %359 = vperm.xlu0 %358, %v50
    %v360 = vpop.permute.xlu0 %359
    %362 = vset.pattern.permute.xlu0 1
    %363 = vperm.xlu0 %362, %v51
    %v364 = vpop.permute.xlu0 %363
    %366 = vset.pattern.permute.xlu0 1
    %367 = vperm.xlu0 %366, %v52
    %v368 = vpop.permute.xlu0 %367
    %370 = vset.pattern.permute.xlu0 1
    %371 = vperm.xlu0 %370, %v53
    %v372 = vpop.permute.xlu0 %371
    %v390 = vunpack.c.l.b16 %v286
    %v391 = vunpack.c.l.b16 %v287
    %v392 = vunpack.c.l.b16 %v288
    %v393 = vunpack.c.l.b16 %v289
    %v394 = vunpack.c.l.b16 %v290
    %v395 = vunpack.c.l.b16 %v291
    %v396 = vunpack.c.l.b16 %v292
    %v397 = vunpack.c.l.b16 %v293
    %v398 = vunpack.c.l.b16 %v294
    %v399 = vunpack.c.l.b16 %v295
    %v400 = vunpack.c.l.b16 %v296
    %v401 = vunpack.c.l.b16 %v297
    %v402 = vunpack.c.l.b16 %v298
    %v403 = vunpack.c.l.b16 %v299
    %v404 = vunpack.c.l.b16 %v300
    %v405 = vunpack.c.l.b16 %v301
    %v406 = vpack.c.b16 %v391, %v390
    %v407 = vpack.c.b16 %v393, %v392
    %v408 = vpack.c.b16 %v395, %v394
    %v409 = vpack.c.b16 %v397, %v396
    %v410 = vpack.c.b16 %v399, %v398
    %v411 = vpack.c.b16 %v401, %v400
    %v412 = vpack.c.b16 %v403, %v402
    %v413 = vpack.c.b16 %v405, %v404
    %422 = vmatpush.bf16.msra.mxu0 %v309
    %423 = vmatpush.bf16.msra.mxu0 %v308
    %424 = vmatpush.bf16.msra.mxu0 %v307
    %425 = vmatpush.bf16.msra.mxu0 %v306
    %426 = vmatpush.bf16.msra.mxu0 %v305
    %427 = vmatpush.bf16.msra.mxu0 %v304
    %428 = vmatpush.bf16.msra.mxu0 %v303
    %429 = vmatpush.bf16.msra.mxu0 %v302
    %430 = vmatmul.bf16.gmra.mxu0 %v406
    %v431 = vpop.f32.mrf.mxu0
    %v432 = vadd.f32 %v312, %v431
    %v433 = vpop.f32.mrf.mxu0
    %v434 = vadd.f32 %v316, %v433
    %435 = vmatmul.bf16.gmra.mxu0 %v407
    %v436 = vpop.f32.mrf.mxu0
    %v437 = vadd.f32 %v320, %v436
    %v438 = vpop.f32.mrf.mxu0
    %v439 = vadd.f32 %v324, %v438
    %440 = vmatmul.bf16.gmra.mxu0 %v408
    %v441 = vpop.f32.mrf.mxu0
    %v442 = vadd.f32 %v328, %v441
    %v443 = vpop.f32.mrf.mxu0
    %v444 = vadd.f32 %v332, %v443
    %445 = vmatmul.bf16.gmra.mxu0 %v409
    %v446 = vpop.f32.mrf.mxu0
    %v447 = vadd.f32 %v336, %v446
    %v448 = vpop.f32.mrf.mxu0
    %v449 = vadd.f32 %v340, %v448
    %450 = vmatmul.bf16.gmra.mxu0 %v410
    %v451 = vpop.f32.mrf.mxu0
    %v452 = vadd.f32 %v344, %v451
    %v453 = vpop.f32.mrf.mxu0
    %v454 = vadd.f32 %v348, %v453
    %455 = vmatmul.bf16.gmra.mxu0 %v411
    %v456 = vpop.f32.mrf.mxu0
    %v457 = vadd.f32 %v352, %v456
    %v458 = vpop.f32.mrf.mxu0
    %v459 = vadd.f32 %v356, %v458
    %460 = vmatmul.bf16.gmra.mxu0 %v412
    %v461 = vpop.f32.mrf.mxu0
    %v462 = vadd.f32 %v360, %v461
    %v463 = vpop.f32.mrf.mxu0
    %v464 = vadd.f32 %v364, %v463
    %465 = vmatmul.bf16.gmra.mxu0 %v413
    %v466 = vpop.f32.mrf.mxu0
    %v467 = vadd.f32 %v368, %v466
    %v468 = vpop.f32.mrf.mxu0
    %v469 = vadd.f32 %v372, %v468
    %470 = vdwg.mxu0
    %v471 = vmax.f32 %v432, 0.0
    %v472 = vmax.f32 %v434, 0.0
    %v473 = vmax.f32 %v437, 0.0
    %v474 = vmax.f32 %v439, 0.0
    %v475 = vmax.f32 %v442, 0.0
    %v476 = vmax.f32 %v444, 0.0
    %v477 = vmax.f32 %v447, 0.0
    %v478 = vmax.f32 %v449, 0.0
    %v479 = vmax.f32 %v452, 0.0
    %v480 = vmax.f32 %v454, 0.0
    %v481 = vmax.f32 %v457, 0.0
    %v482 = vmax.f32 %v459, 0.0
    %v483 = vmax.f32 %v462, 0.0
    %v484 = vmax.f32 %v464, 0.0
    %v485 = vmax.f32 %v467, 0.0
    %v486 = vmax.f32 %v469, 0.0
    %s487 = scalar_lea.vmem [#allocation2], 64
    %v488 = vld [vmem:[%s487] sm:$0xf]
    %v489 = vld [vmem:[%s487 + $0x4] sm:$0xf]
    %v490 = vld [vmem:[%s487 + $0x8] sm:$0xf]
    %v491 = vld [vmem:[%s487 + $0xc] sm:$0xf]
    %v492 = vld [vmem:[%s487 + $0x10] sm:$0xf]
    %v493 = vld [vmem:[%s487 + $0x14] sm:$0xf]
    %v494 = vld [vmem:[%s487 + $0x18] sm:$0xf]
    %v495 = vld [vmem:[%s487 + $0x1c] sm:$0xf]
    %v496 = vld [vmem:[%s487 + $0x20] sm:$0xf]
    %v497 = vld [vmem:[%s487 + $0x24] sm:$0xf]
    %v498 = vld [vmem:[%s487 + $0x28] sm:$0xf]
    %v499 = vld [vmem:[%s487 + $0x2c] sm:$0xf]
    %v500 = vld [vmem:[%s487 + $0x30] sm:$0xf]
    %v501 = vld [vmem:[%s487 + $0x34] sm:$0xf]
    %v502 = vld [vmem:[%s487 + $0x38] sm:$0xf]
    %v503 = vld [vmem:[%s487 + $0x3c] sm:$0xf]
    %v504 = vpack.c.bf16 %v472, %v471
    %v505 = vpack.c.bf16 %v474, %v473
    %v506 = vpack.c.bf16 %v476, %v475
    %v507 = vpack.c.bf16 %v478, %v477
    %v508 = vpack.c.bf16 %v480, %v479
    %v509 = vpack.c.bf16 %v482, %v481
    %v510 = vpack.c.bf16 %v484, %v483
    %v511 = vpack.c.bf16 %v486, %v485
    %512 = vset.pattern.permute.xlu0 2
    %513 = vperm.xlu0 %512, %v38
    %v514 = vpop.permute.xlu0 %513
    %516 = vset.pattern.permute.xlu0 2
    %517 = vperm.xlu0 %516, %v39
    %v518 = vpop.permute.xlu0 %517
    %520 = vset.pattern.permute.xlu0 2
    %521 = vperm.xlu0 %520, %v40
    %v522 = vpop.permute.xlu0 %521
    %524 = vset.pattern.permute.xlu0 2
    %525 = vperm.xlu0 %524, %v41
    %v526 = vpop.permute.xlu0 %525
    %528 = vset.pattern.permute.xlu0 2
    %529 = vperm.xlu0 %528, %v42
    %v530 = vpop.permute.xlu0 %529
    %532 = vset.pattern.permute.xlu0 2
    %533 = vperm.xlu0 %532, %v43
    %v534 = vpop.permute.xlu0 %533
    %536 = vset.pattern.permute.xlu0 2
    %537 = vperm.xlu0 %536, %v44
    %v538 = vpop.permute.xlu0 %537
    %540 = vset.pattern.permute.xlu0 2
    %541 = vperm.xlu0 %540, %v45
    %v542 = vpop.permute.xlu0 %541
    %544 = vset.pattern.permute.xlu0 2
    %545 = vperm.xlu0 %544, %v46
    %v546 = vpop.permute.xlu0 %545
    %548 = vset.pattern.permute.xlu0 2
    %549 = vperm.xlu0 %548, %v47
    %v550 = vpop.permute.xlu0 %549
    %552 = vset.pattern.permute.xlu0 2
    %553 = vperm.xlu0 %552, %v48
    %v554 = vpop.permute.xlu0 %553
    %556 = vset.pattern.permute.xlu0 2
    %557 = vperm.xlu0 %556, %v49
    %v558 = vpop.permute.xlu0 %557
    %560 = vset.pattern.permute.xlu0 2
    %561 = vperm.xlu0 %560, %v50
    %v562 = vpop.permute.xlu0 %561
    %564 = vset.pattern.permute.xlu0 2
    %565 = vperm.xlu0 %564, %v51
    %v566 = vpop.permute.xlu0 %565
    %568 = vset.pattern.permute.xlu0 2
    %569 = vperm.xlu0 %568, %v52
    %v570 = vpop.permute.xlu0 %569
    %572 = vset.pattern.permute.xlu0 2
    %573 = vperm.xlu0 %572, %v53
    %v574 = vpop.permute.xlu0 %573
    %v592 = vunpack.c.l.b16 %v488
    %v593 = vunpack.c.l.b16 %v489
    %v594 = vunpack.c.l.b16 %v490
    %v595 = vunpack.c.l.b16 %v491
    %v596 = vunpack.c.l.b16 %v492
    %v597 = vunpack.c.l.b16 %v493
    %v598 = vunpack.c.l.b16 %v494
    %v599 = vunpack.c.l.b16 %v495
    %v600 = vunpack.c.l.b16 %v496
    %v601 = vunpack.c.l.b16 %v497
    %v602 = vunpack.c.l.b16 %v498
    %v603 = vunpack.c.l.b16 %v499
    %v604 = vunpack.c.l.b16 %v500
    %v605 = vunpack.c.l.b16 %v501
    %v606 = vunpack.c.l.b16 %v502
    %v607 = vunpack.c.l.b16 %v503
    %v608 = vpack.c.b16 %v593, %v592
    %v609 = vpack.c.b16 %v595, %v594
    %v610 = vpack.c.b16 %v597, %v596
    %v611 = vpack.c.b16 %v599, %v598
    %v612 = vpack.c.b16 %v601, %v600
    %v613 = vpack.c.b16 %v603, %v602
    %v614 = vpack.c.b16 %v605, %v604
    %v615 = vpack.c.b16 %v607, %v606
    %624 = vmatpush.bf16.msra.mxu0 %v511
    %625 = vmatpush.bf16.msra.mxu0 %v510
    %626 = vmatpush.bf16.msra.mxu0 %v509
    %627 = vmatpush.bf16.msra.mxu0 %v508
    %628 = vmatpush.bf16.msra.mxu0 %v507
    %629 = vmatpush.bf16.msra.mxu0 %v506
    %630 = vmatpush.bf16.msra.mxu0 %v505
    %631 = vmatpush.bf16.msra.mxu0 %v504
    %632 = vmatmul.bf16.gmra.mxu0 %v608
    %v633 = vpop.f32.mrf.mxu0
    %v634 = vadd.f32 %v514, %v633
    %v635 = vpop.f32.mrf.mxu0
    %v636 = vadd.f32 %v518, %v635
    %637 = vmatmul.bf16.gmra.mxu0 %v609
    %v638 = vpop.f32.mrf.mxu0
    %v639 = vadd.f32 %v522, %v638
    %v640 = vpop.f32.mrf.mxu0
    %v641 = vadd.f32 %v526, %v640
    %642 = vmatmul.bf16.gmra.mxu0 %v610
    %v643 = vpop.f32.mrf.mxu0
    %v644 = vadd.f32 %v530, %v643
    %v645 = vpop.f32.mrf.mxu0
    %v646 = vadd.f32 %v534, %v645
    %647 = vmatmul.bf16.gmra.mxu0 %v611
    %v648 = vpop.f32.mrf.mxu0
    %v649 = vadd.f32 %v538, %v648
    %v650 = vpop.f32.mrf.mxu0
    %v651 = vadd.f32 %v542, %v650
    %652 = vmatmul.bf16.gmra.mxu0 %v612
    %v653 = vpop.f32.mrf.mxu0
    %v654 = vadd.f32 %v546, %v653
    %v655 = vpop.f32.mrf.mxu0
    %v656 = vadd.f32 %v550, %v655
    %657 = vmatmul.bf16.gmra.mxu0 %v613
    %v658 = vpop.f32.mrf.mxu0
    %v659 = vadd.f32 %v554, %v658
    %v660 = vpop.f32.mrf.mxu0
    %v661 = vadd.f32 %v558, %v660
    %662 = vmatmul.bf16.gmra.mxu0 %v614
    %v663 = vpop.f32.mrf.mxu0
    %v664 = vadd.f32 %v562, %v663
    %v665 = vpop.f32.mrf.mxu0
    %v666 = vadd.f32 %v566, %v665
    %667 = vmatmul.bf16.gmra.mxu0 %v615
    %v668 = vpop.f32.mrf.mxu0
    %v669 = vadd.f32 %v570, %v668
    %v670 = vpop.f32.mrf.mxu0
    %v671 = vadd.f32 %v574, %v670
    %672 = vdwg.mxu0
    %v673 = vmax.f32 %v634, 0.0
    %v674 = vmax.f32 %v636, 0.0
    %v675 = vmax.f32 %v639, 0.0
    %v676 = vmax.f32 %v641, 0.0
    %v677 = vmax.f32 %v644, 0.0
    %v678 = vmax.f32 %v646, 0.0
    %v679 = vmax.f32 %v649, 0.0
    %v680 = vmax.f32 %v651, 0.0
    %v681 = vmax.f32 %v654, 0.0
    %v682 = vmax.f32 %v656, 0.0
    %v683 = vmax.f32 %v659, 0.0
    %v684 = vmax.f32 %v661, 0.0
    %v685 = vmax.f32 %v664, 0.0
    %v686 = vmax.f32 %v666, 0.0
    %v687 = vmax.f32 %v669, 0.0
    %v688 = vmax.f32 %v671, 0.0
    %s689 = scalar_lea.vmem [#allocation2], 128
    %v690 = vld [vmem:[%s689] sm:$0xf]
    %v691 = vld [vmem:[%s689 + $0x4] sm:$0xf]
    %v692 = vld [vmem:[%s689 + $0x8] sm:$0xf]
    %v693 = vld [vmem:[%s689 + $0xc] sm:$0xf]
    %v694 = vld [vmem:[%s689 + $0x10] sm:$0xf]
    %v695 = vld [vmem:[%s689 + $0x14] sm:$0xf]
    %v696 = vld [vmem:[%s689 + $0x18] sm:$0xf]
    %v697 = vld [vmem:[%s689 + $0x1c] sm:$0xf]
    %v698 = vld [vmem:[%s689 + $0x20] sm:$0xf]
    %v699 = vld [vmem:[%s689 + $0x24] sm:$0xf]
    %v700 = vld [vmem:[%s689 + $0x28] sm:$0xf]
    %v701 = vld [vmem:[%s689 + $0x2c] sm:$0xf]
    %v702 = vld [vmem:[%s689 + $0x30] sm:$0xf]
    %v703 = vld [vmem:[%s689 + $0x34] sm:$0xf]
    %v704 = vld [vmem:[%s689 + $0x38] sm:$0xf]
    %v705 = vld [vmem:[%s689 + $0x3c] sm:$0xf]
    %v706 = vpack.c.bf16 %v674, %v673
    %v707 = vpack.c.bf16 %v676, %v675
    %v708 = vpack.c.bf16 %v678, %v677
    %v709 = vpack.c.bf16 %v680, %v679
    %v710 = vpack.c.bf16 %v682, %v681
    %v711 = vpack.c.bf16 %v684, %v683
    %v712 = vpack.c.bf16 %v686, %v685
    %v713 = vpack.c.bf16 %v688, %v687
    %714 = vset.pattern.permute.xlu0 3
    %715 = vperm.xlu0 %714, %v38
    %v716 = vpop.permute.xlu0 %715
    %718 = vset.pattern.permute.xlu0 3
    %719 = vperm.xlu0 %718, %v39
    %v720 = vpop.permute.xlu0 %719
    %722 = vset.pattern.permute.xlu0 3
    %723 = vperm.xlu0 %722, %v40
    %v724 = vpop.permute.xlu0 %723
    %726 = vset.pattern.permute.xlu0 3
    %727 = vperm.xlu0 %726, %v41
    %v728 = vpop.permute.xlu0 %727
    %730 = vset.pattern.permute.xlu0 3
    %731 = vperm.xlu0 %730, %v42
    %v732 = vpop.permute.xlu0 %731
    %734 = vset.pattern.permute.xlu0 3
    %735 = vperm.xlu0 %734, %v43
    %v736 = vpop.permute.xlu0 %735
    %738 = vset.pattern.permute.xlu0 3
    %739 = vperm.xlu0 %738, %v44
    %v740 = vpop.permute.xlu0 %739
    %742 = vset.pattern.permute.xlu0 3
    %743 = vperm.xlu0 %742, %v45
    %v744 = vpop.permute.xlu0 %743
    %746 = vset.pattern.permute.xlu0 3
    %747 = vperm.xlu0 %746, %v46
    %v748 = vpop.permute.xlu0 %747
    %750 = vset.pattern.permute.xlu0 3
    %751 = vperm.xlu0 %750, %v47
    %v752 = vpop.permute.xlu0 %751
    %754 = vset.pattern.permute.xlu0 3
    %755 = vperm.xlu0 %754, %v48
    %v756 = vpop.permute.xlu0 %755
    %758 = vset.pattern.permute.xlu0 3
    %759 = vperm.xlu0 %758, %v49
    %v760 = vpop.permute.xlu0 %759
    %762 = vset.pattern.permute.xlu0 3
    %763 = vperm.xlu0 %762, %v50
    %v764 = vpop.permute.xlu0 %763
    %766 = vset.pattern.permute.xlu0 3
    %767 = vperm.xlu0 %766, %v51
    %v768 = vpop.permute.xlu0 %767
    %770 = vset.pattern.permute.xlu0 3
    %771 = vperm.xlu0 %770, %v52
    %v772 = vpop.permute.xlu0 %771
    %774 = vset.pattern.permute.xlu0 3
    %775 = vperm.xlu0 %774, %v53
    %v776 = vpop.permute.xlu0 %775
    %v794 = vunpack.c.l.b16 %v690
    %v795 = vunpack.c.l.b16 %v691
    %v796 = vunpack.c.l.b16 %v692
    %v797 = vunpack.c.l.b16 %v693
    %v798 = vunpack.c.l.b16 %v694
    %v799 = vunpack.c.l.b16 %v695
    %v800 = vunpack.c.l.b16 %v696
    %v801 = vunpack.c.l.b16 %v697
    %v802 = vunpack.c.l.b16 %v698
    %v803 = vunpack.c.l.b16 %v699
    %v804 = vunpack.c.l.b16 %v700
    %v805 = vunpack.c.l.b16 %v701
    %v806 = vunpack.c.l.b16 %v702
    %v807 = vunpack.c.l.b16 %v703
    %v808 = vunpack.c.l.b16 %v704
    %v809 = vunpack.c.l.b16 %v705
    %v810 = vpack.c.b16 %v795, %v794
    %v811 = vpack.c.b16 %v797, %v796
    %v812 = vpack.c.b16 %v799, %v798
    %v813 = vpack.c.b16 %v801, %v800
    %v814 = vpack.c.b16 %v803, %v802
    %v815 = vpack.c.b16 %v805, %v804
    %v816 = vpack.c.b16 %v807, %v806
    %v817 = vpack.c.b16 %v809, %v808
    %826 = vmatpush.bf16.msra.mxu0 %v713
    %827 = vmatpush.bf16.msra.mxu0 %v712
    %828 = vmatpush.bf16.msra.mxu0 %v711
    %829 = vmatpush.bf16.msra.mxu0 %v710
    %830 = vmatpush.bf16.msra.mxu0 %v709
    %831 = vmatpush.bf16.msra.mxu0 %v708
    %832 = vmatpush.bf16.msra.mxu0 %v707
    %833 = vmatpush.bf16.msra.mxu0 %v706
    %834 = vmatmul.bf16.gmra.mxu0 %v810
    %v835 = vpop.f32.mrf.mxu0
    %v836 = vadd.f32 %v716, %v835
    %v837 = vpop.f32.mrf.mxu0
    %v838 = vadd.f32 %v720, %v837
    %839 = vmatmul.bf16.gmra.mxu0 %v811
    %v840 = vpop.f32.mrf.mxu0
    %v841 = vadd.f32 %v724, %v840
    %v842 = vpop.f32.mrf.mxu0
    %v843 = vadd.f32 %v728, %v842
    %844 = vmatmul.bf16.gmra.mxu0 %v812
    %v845 = vpop.f32.mrf.mxu0
    %v846 = vadd.f32 %v732, %v845
    %v847 = vpop.f32.mrf.mxu0
    %v848 = vadd.f32 %v736, %v847
    %849 = vmatmul.bf16.gmra.mxu0 %v813
    %v850 = vpop.f32.mrf.mxu0
    %v851 = vadd.f32 %v740, %v850
    %v852 = vpop.f32.mrf.mxu0
    %v853 = vadd.f32 %v744, %v852
    %854 = vmatmul.bf16.gmra.mxu0 %v814
    %v855 = vpop.f32.mrf.mxu0
    %v856 = vadd.f32 %v748, %v855
    %v857 = vpop.f32.mrf.mxu0
    %v858 = vadd.f32 %v752, %v857
    %859 = vmatmul.bf16.gmra.mxu0 %v815
    %v860 = vpop.f32.mrf.mxu0
    %v861 = vadd.f32 %v756, %v860
    %v862 = vpop.f32.mrf.mxu0
    %v863 = vadd.f32 %v760, %v862
    %864 = vmatmul.bf16.gmra.mxu0 %v816
    %v865 = vpop.f32.mrf.mxu0
    %v866 = vadd.f32 %v764, %v865
    %v867 = vpop.f32.mrf.mxu0
    %v868 = vadd.f32 %v768, %v867
    %869 = vmatmul.bf16.gmra.mxu0 %v817
    %v870 = vpop.f32.mrf.mxu0
    %v871 = vadd.f32 %v772, %v870
    %v872 = vpop.f32.mrf.mxu0
    %v873 = vadd.f32 %v776, %v872
    %874 = vdwg.mxu0
    %v875 = vmax.f32 %v836, 0.0
    %v876 = vmax.f32 %v838, 0.0
    %v877 = vmax.f32 %v841, 0.0
    %v878 = vmax.f32 %v843, 0.0
    %v879 = vmax.f32 %v846, 0.0
    %v880 = vmax.f32 %v848, 0.0
    %v881 = vmax.f32 %v851, 0.0
    %v882 = vmax.f32 %v853, 0.0
    %v883 = vmax.f32 %v856, 0.0
    %v884 = vmax.f32 %v858, 0.0
    %v885 = vmax.f32 %v861, 0.0
    %v886 = vmax.f32 %v863, 0.0
    %v887 = vmax.f32 %v866, 0.0
    %v888 = vmax.f32 %v868, 0.0
    %v889 = vmax.f32 %v871, 0.0
    %v890 = vmax.f32 %v873, 0.0
    %s891 = scalar_lea.vmem [#allocation2], 192
    %v892 = vld [vmem:[%s891] sm:$0xf]
    %v893 = vld [vmem:[%s891 + $0x4] sm:$0xf]
    %v894 = vld [vmem:[%s891 + $0x8] sm:$0xf]
    %v895 = vld [vmem:[%s891 + $0xc] sm:$0xf]
    %v896 = vld [vmem:[%s891 + $0x10] sm:$0xf]
    %v897 = vld [vmem:[%s891 + $0x14] sm:$0xf]
    %v898 = vld [vmem:[%s891 + $0x18] sm:$0xf]
    %v899 = vld [vmem:[%s891 + $0x1c] sm:$0xf]
    %v900 = vld [vmem:[%s891 + $0x20] sm:$0xf]
    %v901 = vld [vmem:[%s891 + $0x24] sm:$0xf]
    %v902 = vld [vmem:[%s891 + $0x28] sm:$0xf]
    %v903 = vld [vmem:[%s891 + $0x2c] sm:$0xf]
    %v904 = vld [vmem:[%s891 + $0x30] sm:$0xf]
    %v905 = vld [vmem:[%s891 + $0x34] sm:$0xf]
    %v906 = vld [vmem:[%s891 + $0x38] sm:$0xf]
    %v907 = vld [vmem:[%s891 + $0x3c] sm:$0xf]
    %v908 = vpack.c.bf16 %v876, %v875
    %v909 = vpack.c.bf16 %v878, %v877
    %v910 = vpack.c.bf16 %v880, %v879
    %v911 = vpack.c.bf16 %v882, %v881
    %v912 = vpack.c.bf16 %v884, %v883
    %v913 = vpack.c.bf16 %v886, %v885
    %v914 = vpack.c.bf16 %v888, %v887
    %v915 = vpack.c.bf16 %v890, %v889
    %916 = vset.pattern.permute.xlu0 4
    %917 = vperm.xlu0 %916, %v38
    %v918 = vpop.permute.xlu0 %917
    %920 = vset.pattern.permute.xlu0 4
    %921 = vperm.xlu0 %920, %v39
    %v922 = vpop.permute.xlu0 %921
    %924 = vset.pattern.permute.xlu0 4
    %925 = vperm.xlu0 %924, %v40
    %v926 = vpop.permute.xlu0 %925
    %928 = vset.pattern.permute.xlu0 4
    %929 = vperm.xlu0 %928, %v41
    %v930 = vpop.permute.xlu0 %929
    %932 = vset.pattern.permute.xlu0 4
    %933 = vperm.xlu0 %932, %v42
    %v934 = vpop.permute.xlu0 %933
    %936 = vset.pattern.permute.xlu0 4
    %937 = vperm.xlu0 %936, %v43
    %v938 = vpop.permute.xlu0 %937
    %940 = vset.pattern.permute.xlu0 4
    %941 = vperm.xlu0 %940, %v44
    %v942 = vpop.permute.xlu0 %941
    %944 = vset.pattern.permute.xlu0 4
    %945 = vperm.xlu0 %944, %v45
    %v946 = vpop.permute.xlu0 %945
    %948 = vset.pattern.permute.xlu0 4
    %949 = vperm.xlu0 %948, %v46
    %v950 = vpop.permute.xlu0 %949
    %952 = vset.pattern.permute.xlu0 4
    %953 = vperm.xlu0 %952, %v47
    %v954 = vpop.permute.xlu0 %953
    %956 = vset.pattern.permute.xlu0 4
    %957 = vperm.xlu0 %956, %v48
    %v958 = vpop.permute.xlu0 %957
    %960 = vset.pattern.permute.xlu0 4
    %961 = vperm.xlu0 %960, %v49
    %v962 = vpop.permute.xlu0 %961
    %964 = vset.pattern.permute.xlu0 4
    %965 = vperm.xlu0 %964, %v50
    %v966 = vpop.permute.xlu0 %965
    %968 = vset.pattern.permute.xlu0 4
    %969 = vperm.xlu0 %968, %v51
    %v970 = vpop.permute.xlu0 %969
    %972 = vset.pattern.permute.xlu0 4
    %973 = vperm.xlu0 %972, %v52
    %v974 = vpop.permute.xlu0 %973
    %976 = vset.pattern.permute.xlu0 4
    %977 = vperm.xlu0 %976, %v53
    %v978 = vpop.permute.xlu0 %977
    %v996 = vunpack.c.l.b16 %v892
    %v997 = vunpack.c.l.b16 %v893
    %v998 = vunpack.c.l.b16 %v894
    %v999 = vunpack.c.l.b16 %v895
    %v1000 = vunpack.c.l.b16 %v896
    %v1001 = vunpack.c.l.b16 %v897
    %v1002 = vunpack.c.l.b16 %v898
    %v1003 = vunpack.c.l.b16 %v899
    %v1004 = vunpack.c.l.b16 %v900
    %v1005 = vunpack.c.l.b16 %v901
    %v1006 = vunpack.c.l.b16 %v902
    %v1007 = vunpack.c.l.b16 %v903
    %v1008 = vunpack.c.l.b16 %v904
    %v1009 = vunpack.c.l.b16 %v905
    %v1010 = vunpack.c.l.b16 %v906
    %v1011 = vunpack.c.l.b16 %v907
    %v1012 = vpack.c.b16 %v997, %v996
    %v1013 = vpack.c.b16 %v999, %v998
    %v1014 = vpack.c.b16 %v1001, %v1000
    %v1015 = vpack.c.b16 %v1003, %v1002
    %v1016 = vpack.c.b16 %v1005, %v1004
    %v1017 = vpack.c.b16 %v1007, %v1006
    %v1018 = vpack.c.b16 %v1009, %v1008
    %v1019 = vpack.c.b16 %v1011, %v1010
    %1028 = vmatpush.bf16.msra.mxu0 %v915
    %1029 = vmatpush.bf16.msra.mxu0 %v914
    %1030 = vmatpush.bf16.msra.mxu0 %v913
    %1031 = vmatpush.bf16.msra.mxu0 %v912
    %1032 = vmatpush.bf16.msra.mxu0 %v911
    %1033 = vmatpush.bf16.msra.mxu0 %v910
    %1034 = vmatpush.bf16.msra.mxu0 %v909
    %1035 = vmatpush.bf16.msra.mxu0 %v908
    %1036 = vmatmul.bf16.gmra.mxu0 %v1012
    %v1037 = vpop.f32.mrf.mxu0
    %v1038 = vadd.f32 %v918, %v1037
    %v1039 = vpop.f32.mrf.mxu0
    %v1040 = vadd.f32 %v922, %v1039
    %1041 = vmatmul.bf16.gmra.mxu0 %v1013
    %v1042 = vpop.f32.mrf.mxu0
    %v1043 = vadd.f32 %v926, %v1042
    %v1044 = vpop.f32.mrf.mxu0
    %v1045 = vadd.f32 %v930, %v1044
    %1046 = vmatmul.bf16.gmra.mxu0 %v1014
    %v1047 = vpop.f32.mrf.mxu0
    %v1048 = vadd.f32 %v934, %v1047
    %v1049 = vpop.f32.mrf.mxu0
    %v1050 = vadd.f32 %v938, %v1049
    %1051 = vmatmul.bf16.gmra.mxu0 %v1015
    %v1052 = vpop.f32.mrf.mxu0
    %v1053 = vadd.f32 %v942, %v1052
    %v1054 = vpop.f32.mrf.mxu0
    %v1055 = vadd.f32 %v946, %v1054
    %1056 = vmatmul.bf16.gmra.mxu0 %v1016
    %v1057 = vpop.f32.mrf.mxu0
    %v1058 = vadd.f32 %v950, %v1057
    %v1059 = vpop.f32.mrf.mxu0
    %v1060 = vadd.f32 %v954, %v1059
    %1061 = vmatmul.bf16.gmra.mxu0 %v1017
    %v1062 = vpop.f32.mrf.mxu0
    %v1063 = vadd.f32 %v958, %v1062
    %v1064 = vpop.f32.mrf.mxu0
    %v1065 = vadd.f32 %v962, %v1064
    %1066 = vmatmul.bf16.gmra.mxu0 %v1018
    %v1067 = vpop.f32.mrf.mxu0
    %v1068 = vadd.f32 %v966, %v1067
    %v1069 = vpop.f32.mrf.mxu0
    %v1070 = vadd.f32 %v970, %v1069
    %1071 = vmatmul.bf16.gmra.mxu0 %v1019
    %v1072 = vpop.f32.mrf.mxu0
    %v1073 = vadd.f32 %v974, %v1072
    %v1074 = vpop.f32.mrf.mxu0
    %v1075 = vadd.f32 %v978, %v1074
    %1076 = vdwg.mxu0
    %v1077 = vmax.f32 %v1038, 0.0
    %v1078 = vmax.f32 %v1040, 0.0
    %v1079 = vmax.f32 %v1043, 0.0
    %v1080 = vmax.f32 %v1045, 0.0
    %v1081 = vmax.f32 %v1048, 0.0
    %v1082 = vmax.f32 %v1050, 0.0
    %v1083 = vmax.f32 %v1053, 0.0
    %v1084 = vmax.f32 %v1055, 0.0
    %v1085 = vmax.f32 %v1058, 0.0
    %v1086 = vmax.f32 %v1060, 0.0
    %v1087 = vmax.f32 %v1063, 0.0
    %v1088 = vmax.f32 %v1065, 0.0
    %v1089 = vmax.f32 %v1068, 0.0
    %v1090 = vmax.f32 %v1070, 0.0
    %v1091 = vmax.f32 %v1073, 0.0
    %v1092 = vmax.f32 %v1075, 0.0
    %s1093 = scalar_lea.vmem [#allocation2], 256
    %v1094 = vld [vmem:[%s1093] sm:$0xf]
    %v1095 = vld [vmem:[%s1093 + $0x4] sm:$0xf]
    %v1096 = vld [vmem:[%s1093 + $0x8] sm:$0xf]
    %v1097 = vld [vmem:[%s1093 + $0xc] sm:$0xf]
    %v1098 = vld [vmem:[%s1093 + $0x10] sm:$0xf]
    %v1099 = vld [vmem:[%s1093 + $0x14] sm:$0xf]
    %v1100 = vld [vmem:[%s1093 + $0x18] sm:$0xf]
    %v1101 = vld [vmem:[%s1093 + $0x1c] sm:$0xf]
    %v1102 = vld [vmem:[%s1093 + $0x20] sm:$0xf]
    %v1103 = vld [vmem:[%s1093 + $0x24] sm:$0xf]
    %v1104 = vld [vmem:[%s1093 + $0x28] sm:$0xf]
    %v1105 = vld [vmem:[%s1093 + $0x2c] sm:$0xf]
    %v1106 = vld [vmem:[%s1093 + $0x30] sm:$0xf]
    %v1107 = vld [vmem:[%s1093 + $0x34] sm:$0xf]
    %v1108 = vld [vmem:[%s1093 + $0x38] sm:$0xf]
    %v1109 = vld [vmem:[%s1093 + $0x3c] sm:$0xf]
    %v1110 = vpack.c.bf16 %v1078, %v1077
    %v1111 = vpack.c.bf16 %v1080, %v1079
    %v1112 = vpack.c.bf16 %v1082, %v1081
    %v1113 = vpack.c.bf16 %v1084, %v1083
    %v1114 = vpack.c.bf16 %v1086, %v1085
    %v1115 = vpack.c.bf16 %v1088, %v1087
    %v1116 = vpack.c.bf16 %v1090, %v1089
    %v1117 = vpack.c.bf16 %v1092, %v1091
    %1118 = vset.pattern.permute.xlu0 5
    %1119 = vperm.xlu0 %1118, %v38
    %v1120 = vpop.permute.xlu0 %1119
    %1122 = vset.pattern.permute.xlu0 5
    %1123 = vperm.xlu0 %1122, %v39
    %v1124 = vpop.permute.xlu0 %1123
    %1126 = vset.pattern.permute.xlu0 5
    %1127 = vperm.xlu0 %1126, %v40
    %v1128 = vpop.permute.xlu0 %1127
    %1130 = vset.pattern.permute.xlu0 5
    %1131 = vperm.xlu0 %1130, %v41
    %v1132 = vpop.permute.xlu0 %1131
    %1134 = vset.pattern.permute.xlu0 5
    %1135 = vperm.xlu0 %1134, %v42
    %v1136 = vpop.permute.xlu0 %1135
    %1138 = vset.pattern.permute.xlu0 5
    %1139 = vperm.xlu0 %1138, %v43
    %v1140 = vpop.permute.xlu0 %1139
    %1142 = vset.pattern.permute.xlu0 5
    %1143 = vperm.xlu0 %1142, %v44
    %v1144 = vpop.permute.xlu0 %1143
    %1146 = vset.pattern.permute.xlu0 5
    %1147 = vperm.xlu0 %1146, %v45
    %v1148 = vpop.permute.xlu0 %1147
    %1150 = vset.pattern.permute.xlu0 5
    %1151 = vperm.xlu0 %1150, %v46
    %v1152 = vpop.permute.xlu0 %1151
    %1154 = vset.pattern.permute.xlu0 5
    %1155 = vperm.xlu0 %1154, %v47
    %v1156 = vpop.permute.xlu0 %1155
    %1158 = vset.pattern.permute.xlu0 5
    %1159 = vperm.xlu0 %1158, %v48
    %v1160 = vpop.permute.xlu0 %1159
    %1162 = vset.pattern.permute.xlu0 5
    %1163 = vperm.xlu0 %1162, %v49
    %v1164 = vpop.permute.xlu0 %1163
    %1166 = vset.pattern.permute.xlu0 5
    %1167 = vperm.xlu0 %1166, %v50
    %v1168 = vpop.permute.xlu0 %1167
    %1170 = vset.pattern.permute.xlu0 5
    %1171 = vperm.xlu0 %1170, %v51
    %v1172 = vpop.permute.xlu0 %1171
    %1174 = vset.pattern.permute.xlu0 5
    %1175 = vperm.xlu0 %1174, %v52
    %v1176 = vpop.permute.xlu0 %1175
    %1178 = vset.pattern.permute.xlu0 5
    %1179 = vperm.xlu0 %1178, %v53
    %v1180 = vpop.permute.xlu0 %1179
    %v1198 = vunpack.c.l.b16 %v1094
    %v1199 = vunpack.c.l.b16 %v1095
    %v1200 = vunpack.c.l.b16 %v1096
    %v1201 = vunpack.c.l.b16 %v1097
    %v1202 = vunpack.c.l.b16 %v1098
    %v1203 = vunpack.c.l.b16 %v1099
    %v1204 = vunpack.c.l.b16 %v1100
    %v1205 = vunpack.c.l.b16 %v1101
    %v1206 = vunpack.c.l.b16 %v1102
    %v1207 = vunpack.c.l.b16 %v1103
    %v1208 = vunpack.c.l.b16 %v1104
    %v1209 = vunpack.c.l.b16 %v1105
    %v1210 = vunpack.c.l.b16 %v1106
    %v1211 = vunpack.c.l.b16 %v1107
    %v1212 = vunpack.c.l.b16 %v1108
    %v1213 = vunpack.c.l.b16 %v1109
    %v1214 = vpack.c.b16 %v1199, %v1198
    %v1215 = vpack.c.b16 %v1201, %v1200
    %v1216 = vpack.c.b16 %v1203, %v1202
    %v1217 = vpack.c.b16 %v1205, %v1204
    %v1218 = vpack.c.b16 %v1207, %v1206
    %v1219 = vpack.c.b16 %v1209, %v1208
    %v1220 = vpack.c.b16 %v1211, %v1210
    %v1221 = vpack.c.b16 %v1213, %v1212
    %1230 = vmatpush.bf16.msra.mxu0 %v1117
    %1231 = vmatpush.bf16.msra.mxu0 %v1116
    %1232 = vmatpush.bf16.msra.mxu0 %v1115
    %1233 = vmatpush.bf16.msra.mxu0 %v1114
    %1234 = vmatpush.bf16.msra.mxu0 %v1113
    %1235 = vmatpush.bf16.msra.mxu0 %v1112
    %1236 = vmatpush.bf16.msra.mxu0 %v1111
    %1237 = vmatpush.bf16.msra.mxu0 %v1110
    %1238 = vmatmul.bf16.gmra.mxu0 %v1214
    %v1239 = vpop.f32.mrf.mxu0
    %v1240 = vadd.f32 %v1120, %v1239
    %v1241 = vpop.f32.mrf.mxu0
    %v1242 = vadd.f32 %v1124, %v1241
    %1243 = vmatmul.bf16.gmra.mxu0 %v1215
    %v1244 = vpop.f32.mrf.mxu0
    %v1245 = vadd.f32 %v1128, %v1244
    %v1246 = vpop.f32.mrf.mxu0
    %v1247 = vadd.f32 %v1132, %v1246
    %1248 = vmatmul.bf16.gmra.mxu0 %v1216
    %v1249 = vpop.f32.mrf.mxu0
    %v1250 = vadd.f32 %v1136, %v1249
    %v1251 = vpop.f32.mrf.mxu0
    %v1252 = vadd.f32 %v1140, %v1251
    %1253 = vmatmul.bf16.gmra.mxu0 %v1217
    %v1254 = vpop.f32.mrf.mxu0
    %v1255 = vadd.f32 %v1144, %v1254
    %v1256 = vpop.f32.mrf.mxu0
    %v1257 = vadd.f32 %v1148, %v1256
    %1258 = vmatmul.bf16.gmra.mxu0 %v1218
    %v1259 = vpop.f32.mrf.mxu0
    %v1260 = vadd.f32 %v1152, %v1259
    %v1261 = vpop.f32.mrf.mxu0
    %v1262 = vadd.f32 %v1156, %v1261
    %1263 = vmatmul.bf16.gmra.mxu0 %v1219
    %v1264 = vpop.f32.mrf.mxu0
    %v1265 = vadd.f32 %v1160, %v1264
    %v1266 = vpop.f32.mrf.mxu0
    %v1267 = vadd.f32 %v1164, %v1266
    %1268 = vmatmul.bf16.gmra.mxu0 %v1220
    %v1269 = vpop.f32.mrf.mxu0
    %v1270 = vadd.f32 %v1168, %v1269
    %v1271 = vpop.f32.mrf.mxu0
    %v1272 = vadd.f32 %v1172, %v1271
    %1273 = vmatmul.bf16.gmra.mxu0 %v1221
    %v1274 = vpop.f32.mrf.mxu0
    %v1275 = vadd.f32 %v1176, %v1274
    %v1276 = vpop.f32.mrf.mxu0
    %v1277 = vadd.f32 %v1180, %v1276
    %1278 = vdwg.mxu0
    %v1279 = vmax.f32 %v1240, 0.0
    %v1280 = vmax.f32 %v1242, 0.0
    %v1281 = vmax.f32 %v1245, 0.0
    %v1282 = vmax.f32 %v1247, 0.0
    %v1283 = vmax.f32 %v1250, 0.0
    %v1284 = vmax.f32 %v1252, 0.0
    %v1285 = vmax.f32 %v1255, 0.0
    %v1286 = vmax.f32 %v1257, 0.0
    %v1287 = vmax.f32 %v1260, 0.0
    %v1288 = vmax.f32 %v1262, 0.0
    %v1289 = vmax.f32 %v1265, 0.0
    %v1290 = vmax.f32 %v1267, 0.0
    %v1291 = vmax.f32 %v1270, 0.0
    %v1292 = vmax.f32 %v1272, 0.0
    %v1293 = vmax.f32 %v1275, 0.0
    %v1294 = vmax.f32 %v1277, 0.0
    %v1295 = vld [vmem:[%s3] sm:$0xf]
    %v1296 = vpack.c.bf16 %v1280, %v1279
    %v1297 = vpack.c.bf16 %v1282, %v1281
    %v1298 = vpack.c.bf16 %v1284, %v1283
    %v1299 = vpack.c.bf16 %v1286, %v1285
    %v1300 = vpack.c.bf16 %v1288, %v1287
    %v1301 = vpack.c.bf16 %v1290, %v1289
    %v1302 = vpack.c.bf16 %v1292, %v1291
    %v1303 = vpack.c.bf16 %v1294, %v1293
    %1304 = vmatpush.bf16.msra.mxu0 %v1303
    %1305 = vmatpush.bf16.msra.mxu0 %v1302
    %1306 = vmatpush.bf16.msra.mxu0 %v1301
    %1307 = vmatpush.bf16.msra.mxu0 %v1300
    %1308 = vmatpush.bf16.msra.mxu0 %v1299
    %1309 = vmatpush.bf16.msra.mxu0 %v1298
    %1310 = vmatpush.bf16.msra.mxu0 %v1297
    %1311 = vmatpush.bf16.msra.mxu0 %v1296
    %1312 = vmatmul.bf16.gmra.mxu0 %v1295
    %v1313 = vpop.f32.mrf.mxu0
    %v1314 = vadd.f32 0.0, %v1313
    %v1315 = vpop.f32.mrf.mxu0
    %1316 = vdwg.mxu0
    %1317 = vset.pattern.permute.xlu0 6
    %1318 = vperm.xlu0 %1317, %v38
    %v1319 = vpop.permute.xlu0 %1318
    %v1321 = vadd.f32 %v1314, %v1319
    %v1322 = vand.u32 2147483647, %v1321
    %vm1323 = vcmask 122880
    %1324 = vst.msk [vmem:[#allocation5] sm:$0x1] %vm1323, %v1322
    // Predicated region
    $region26: #{localizer_forward.1} parent=1 // pred_check
      _
    $region27: #{localizer_forward.1} parent=1 // pred_check_branch
      %1326 = sbr.rel (0) target = $region29
    $region28: #{localizer_forward.1} parent=1 // pred_region
      %1328 = vsyncadd [#allocation4], 0
      %s1330 = sshll.u32 [#allocation5], 4
      %s1331 = int_to_ptr.vmem [resolvable:$true] %s1330
      %s1332 = sshll.u32 %s5, 4
      %s1333 = int_to_ptr.hbm [resolvable:$true] %s1332
      %1335 = dma.vmem_to_hbm [thread:$0]  %s1331, 16, %s1333, [#allocation4]
    $region29: #{localizer_forward.1} parent=1 // pred_fallthru
      _
    // Predicated region
    $region30: #{localizer_forward.1} parent=1 // pred_check
      _
    $region31: #{localizer_forward.1} parent=1 // pred_check_branch
      %1337 = sbr.rel (0) target = $region33
    $region32: #{localizer_forward.1} parent=1 // pred_region
      %1339 = dma.done [#allocation4], 16
    $region33: #{localizer_forward.1} parent=1 // pred_fallthru
      _
    %1340 = vsyncpa [#allocation3], 1
    %1341 = vsyncpa [#allocation4], 1

</llo_original>
